<compile_context>
chip_gen: v6e
topology: v6e:2x2x1
jax: 0.10.0
libtpu: 0.0.40
codegen_flags: <defaults>
</compile_context>

<pallas_src>
import functools

import jax
import jax.numpy as jnp
from jax.experimental import pallas as pl
from jax.experimental.pallas import tpu as pltpu


# ----------------------------------------------------------------------------
# Generation-aware VMEM budget
# ----------------------------------------------------------------------------
_VMEM_CAP_CACHE = None


def _vmem_limit_bytes():
    """Scoped-VMEM limit: ~3/4 of physical per-core VMEM, capped at 96 MiB.

    v5e/v6e (128 MiB physical) -> 96 MiB; v7x (64 MiB per TC) -> 48 MiB.
    Falls back to the conservative v7x figure if the query is unavailable.
    """
    global _VMEM_CAP_CACHE
    if _VMEM_CAP_CACHE is None:
        cap = 64 * 1024 * 1024
        try:
            cap = int(pltpu.get_tpu_info().vmem_capacity_bytes)
        except Exception:
            pass
        _VMEM_CAP_CACHE = cap
    return min((_VMEM_CAP_CACHE * 3) // 4, 96 * 1024 * 1024)


def _row_tile(m, cap):
    """Row (sublane) tile: full m if small, else largest multiple of 8 <= cap."""
    if m <= cap:
        return m
    return max(8, (cap // 8) * 8)


def _lane_tile(l, cap):
    """Lane tile: full l if it fits, else a 128-multiple (prefer a divisor of l)."""
    cap = max(128, cap)
    if l <= cap:
        return l
    t = (cap // 128) * 128
    d = t
    while d >= 128:
        if l % d == 0:
            return d
        d -= 128
    return t          # no fitting 128-multiple divisor: masked tail handles the rest


# ----------------------------------------------------------------------------
# Fused path: one batch per grid step, x read once + written once.
# ----------------------------------------------------------------------------
def _fused_eca_kernel(x_ref, w_ref, out_ref, spad_ref):
    """x_ref/out_ref: (1, C, L).  w_ref: (k, 1) f32 taps pre-scaled by 1/L.

    spad_ref: (C + 2*halo, 1) f32 scratch.  The per-channel spatial sums are
    stored at the sublane-aligned offset `halo`; the zero rows on either side
    reproduce Conv1d's zero padding, so every conv tap is a static slice.
    """
    c = x_ref.shape[1]
    k = w_ref.shape[0]
    pad = (k - 1) // 2
    halo = (spad_ref.shape[0] - c) // 2

    x = x_ref[0]                                                     # (C, L)

    # Per-channel spatial sums into the zeroed halo scratch (aligned offset).
    spad_ref[...] = jnp.zeros_like(spad_ref)
    spad_ref[halo:halo + c, :] = jnp.sum(
        x.astype(jnp.float32), axis=-1, keepdims=True)

    # k-tap channel conv (taps already carry the 1/(H*W) mean factor) + sigmoid.
    s = spad_ref[...]                                                # (C + 2*halo, 1)
    wt = w_ref[...]                                                  # (k, 1)
    base = halo - pad
    acc = s[base:base + c, :] * wt[0:1, :]
    for j in range(1, k):                                            # k static -> unrolled
        acc = acc + s[base + j:base + j + c, :] * wt[j:j + 1, :]
    gate = jax.nn.sigmoid(acc)                                       # (C, 1) f32

    out_ref[0] = (x * gate).astype(out_ref.dtype)                    # broadcast over lanes


def _eca_fused(x_bcl, w_taps, pad, vmem_limit):
    b, c, l = x_bcl.shape
    k = w_taps.shape[0]
    halo = max(8, ((pad + 7) // 8) * 8)          # sublane-aligned halo (pad <= 8 for ECA)
    itemsize = x_bcl.dtype.itemsize
    return pl.pallas_call(
        _fused_eca_kernel,
        out_shape=jax.ShapeDtypeStruct((b, c, l), x_bcl.dtype),
        grid_spec=pltpu.PrefetchScalarGridSpec(
            num_scalar_prefetch=0,
            grid=(b,),
            in_specs=[
                pl.BlockSpec((1, c, l), lambda bi: (bi, 0, 0)),
                pl.BlockSpec((k, 1), lambda bi: (0, 0)),
            ],
            out_specs=pl.BlockSpec((1, c, l), lambda bi: (bi, 0, 0)),
            scratch_shapes=[pltpu.VMEM((c + 2 * halo, 1), jnp.float32)],
        ),
        compiler_params=pltpu.CompilerParams(
            dimension_semantics=("parallel",),
            vmem_limit_bytes=vmem_limit),
        cost_estimate=pl.CostEstimate(
            flops=2 * b * c * l + 2 * b * k * c,
            transcendentals=b * c,
            bytes_accessed=2 * b * c * l * itemsize + k * 4),
    )(x_bcl, w_taps)


# ----------------------------------------------------------------------------
# Fallback path: two streaming passes (for slabs too large to fuse).
# ----------------------------------------------------------------------------
def _spatial_sum_kernel(x_ref, sum_ref):
    """x_ref: (tm, tl) chunk of x viewed as (B*C, H*W); sum_ref: (tm, 1) accumulator."""
    @pl.when(pl.program_id(1) == 0)
    def _():
        sum_ref[...] = jnp.zeros_like(sum_ref)
    sum_ref[...] += jnp.sum(x_ref[...].astype(jnp.float32), axis=1, keepdims=True)


def _spatial_sum_masked_kernel(l_total, x_ref, sum_ref):
    """Same as above, masking the partial spatial tail when tl does not divide H*W."""
    @pl.when(pl.program_id(1) == 0)
    def _():
        sum_ref[...] = jnp.zeros_like(sum_ref)
    tl = x_ref.shape[1]
    col = jax.lax.broadcasted_iota(jnp.int32, x_ref.shape, 1) + pl.program_id(1) * tl
    xv = jnp.where(col < l_total, x_ref[...].astype(jnp.float32), 0.0)
    sum_ref[...] += jnp.sum(xv, axis=1, keepdims=True)


def _scale_kernel(x_ref, gate_ref, out_ref):
    """Pure row-broadcast multiply: x (tm, tl) * gate (tm, 1)."""
    out_ref[...] = (x_ref[...] * gate_ref[...]).astype(out_ref.dtype)


def _eca_two_pass(x_bcl, conv_weight, pad, vmem_limit):
    b, c, l = x_bcl.shape
    k = conv_weight.shape[-1]
    m = b * c
    itemsize = x_bcl.dtype.itemsize
    tile_bytes = max(1 << 20, vmem_limit // 8)     # pass 2: 2 big arrays x 2 buffers
    budget_elems = max(128, tile_bytes // itemsize)

    x_rows = x_bcl.reshape(m, l)                   # free view of contiguous NCHW

    # ---- pass 1: per-(b, c) spatial sums --------------------------------------
    tm1 = _row_tile(m, 1024)
    tl1 = _lane_tile(l, budget_elems // max(tm1, 1))
    sum_body = (_spatial_sum_kernel if l % tl1 == 0
                else functools.partial(_spatial_sum_masked_kernel, l))
    sums = pl.pallas_call(
        sum_body,
        out_shape=jax.ShapeDtypeStruct((m, 1), jnp.float32),
        grid_spec=pltpu.PrefetchScalarGridSpec(
            num_scalar_prefetch=0,
            grid=(pl.cdiv(m, tm1), pl.cdiv(l, tl1)),
            in_specs=[pl.BlockSpec((tm1, tl1), lambda i, j: (i, j))],
            out_specs=pl.BlockSpec((tm1, 1), lambda i, j: (i, 0)),
        ),
        compiler_params=pltpu.CompilerParams(
            dimension_semantics=("parallel", "arbitrary"),
            vmem_limit_bytes=vmem_limit),
        cost_estimate=pl.CostEstimate(
            flops=m * l, transcendentals=0,
            bytes_accessed=m * l * itemsize + m * 4),
    )(x_rows)

    # ---- tiny O(B*C) glue: k-tap channel conv + sigmoid gate -------------------
    wv = conv_weight.reshape(k).astype(jnp.float32)
    means = sums.reshape(b, c) * (1.0 / l)
    means_pad = jnp.pad(means, ((0, 0), (pad, pad)))
    conv = sum(wv[j] * means_pad[:, j:j + c] for j in range(k))   # torch cross-correlation
    gate = jax.nn.sigmoid(conv).reshape(m, 1)                     # (B*C, 1) f32

    # ---- pass 2: pure row-broadcast multiply (gate precomputed, no per-step conv) ----
    tm2 = _row_tile(m, 512)
    tl2 = _lane_tile(l, budget_elems // max(tm2, 1))
    out = pl.pallas_call(
        _scale_kernel,
        out_shape=jax.ShapeDtypeStruct((m, l), x_bcl.dtype),
        grid_spec=pltpu.PrefetchScalarGridSpec(
            num_scalar_prefetch=0,
            grid=(pl.cdiv(m, tm2), pl.cdiv(l, tl2)),
            in_specs=[
                pl.BlockSpec((tm2, tl2), lambda i, j: (i, j)),
                pl.BlockSpec((tm2, 1), lambda i, j: (i, 0)),
            ],
            out_specs=pl.BlockSpec((tm2, tl2), lambda i, j: (i, j)),
        ),
        compiler_params=pltpu.CompilerParams(
            dimension_semantics=("parallel", "parallel"),
            vmem_limit_bytes=vmem_limit),
        cost_estimate=pl.CostEstimate(
            flops=m * l, transcendentals=0,
            bytes_accessed=2 * m * l * itemsize + m * 4),
    )(x_rows, gate)

    return out.reshape(b, c, l)


# ----------------------------------------------------------------------------
# Public entry point
# ----------------------------------------------------------------------------
@functools.partial(jax.jit, static_argnames=("force_two_pass",))
def eca_forward(x, conv_weight, force_two_pass=False):
    """ECA forward.  x: (B, C, H, W); conv_weight: (1, 1, k) Conv1d weight (no bias)."""
    b, c, h, w = x.shape
    k = conv_weight.shape[-1]
    pad = (k - 1) // 2
    l = h * w
    itemsize = x.dtype.itemsize

    vmem_limit = _vmem_limit_bytes()
    x_bcl = x.reshape(b, c, l)                      # free view of contiguous NCHW

    # Fused path needs in + out double-buffered plus f32 temporaries for one slab.
    slab = c * l
    fused_need = 4 * slab * itemsize + 2 * slab * 4 + (256 << 10)
    if (not force_two_pass) and fused_need <= vmem_limit:
        w_taps = conv_weight.reshape(k, 1).astype(jnp.float32) * (1.0 / l)
        out = _eca_fused(x_bcl, w_taps, pad, vmem_limit)
    else:
        out = _eca_two_pass(x_bcl, conv_weight, pad, vmem_limit)

    return out.reshape(b, c, h, w)


def _reference(x, conv_weight):
    """Plain-JAX mirror of the PyTorch eca_layer forward (inference)."""
    b, c, h, w = x.shape
    k = conv_weight.shape[-1]
    pad = (k - 1) // 2
    wv = conv_weight.reshape(k)
    y = jnp.mean(x, axis=(2, 3))                               # (B, C)
    y_pad = jnp.pad(y, ((0, 0), (pad, pad)))
    conv = sum(wv[j] * y_pad[:, j:j + c] for j in range(k))    # cross-correlation (torch conv)
    gate = jax.nn.sigmoid(conv)                                # (B, C)
    return x * gate[:, :, None, None]


if __name__ == "__main__":
    # eca_layer(k_size=3) applied to x of shape (2, 4, 16, 16)
    B, C, H, W = 2, 4, 16, 16
    K = 3

    key = jax.random.PRNGKey(0)
    kx, kw = jax.random.split(key, 2)
    x = jax.random.normal(kx, (B, C, H, W), dtype=jnp.float32)
    # xavier_uniform_ for Conv1d(1, 1, K): bound = sqrt(6 / (fan_in + fan_out)) = sqrt(6 / (2K))
    bound = (6.0 / (2.0 * K)) ** 0.5
    conv_weight = jax.random.uniform(kw, (1, 1, K), dtype=jnp.float32,
                                     minval=-bound, maxval=bound)

    ref = _reference(x, conv_weight)

    # Primary (fused, 1-read/1-write) path.
    out = eca_forward(x, conv_weight)
    jax.block_until_ready(out)
    assert out.shape == (B, C, H, W), out.shape
    assert jnp.allclose(out, ref, atol=1e-4, rtol=1e-4), \
        float(jnp.max(jnp.abs(out - ref)))

    # Also exercise the streaming two-pass fallback path.
    out2 = eca_forward(x, conv_weight, force_two_pass=True)
    jax.block_until_ready(out2)
    assert jnp.allclose(out2, ref, atol=1e-4, rtol=1e-4), \
        float(jnp.max(jnp.abs(out2 - ref)))

    print("KERNEL_OK")
</pallas_src>

<mosaic_0001>
module attributes {stable_mosaic.version = 11 : i64} {
  func.func @_fused_eca_kernel(%arg0: i32, %arg1: memref<1x4x256xf32, #tpu.memory_space<vmem>>, %arg2: memref<3x1xf32, #tpu.memory_space<vmem>>, %arg3: memref<1x4x256xf32, #tpu.memory_space<vmem>>, %arg4: memref<20x1xf32, #tpu.memory_space<vmem>>) attributes {dimension_semantics = [#tpu.dimension_semantics<parallel>], iteration_bounds = array<i64: 2>, scalar_prefetch = 0 : i64, scratch_operands = 1 : i64, tpu.core_type = #tpu.core_type<tc>, window_params = [{transform_indices = @transform_0, window_bounds = array<i64: 1, 4, 256>}, {pipeline_mode = #tpu.pipeline_mode<synchronous>, transform_indices = @transform_1, window_bounds = array<i64: 3, 1>}, {transform_indices = @transform_2, window_bounds = array<i64: 1, 4, 256>}]} {
    %c0 = arith.constant 0 : index
    %c0_0 = arith.constant 0 : index
    %c0_1 = arith.constant 0 : index
    %0 = vector.load %arg1[%c0, %c0_0, %c0_1] : memref<1x4x256xf32, #tpu.memory_space<vmem>>, vector<1x4x256xf32>
    %1 = vector.shape_cast %0 : vector<1x4x256xf32> to vector<4x256xf32>
    %cst = arith.constant 0.000000e+00 : f32
    %2 = vector.broadcast %cst : f32 to vector<20x1xf32>
    %c0_2 = arith.constant 0 : index
    %c0_3 = arith.constant 0 : index
    %3 = vector.load %arg4[%c0_2, %c0_3] : memref<20x1xf32, #tpu.memory_space<vmem>>, vector<20x1xf32>
    tpu.vector_store %arg4[%c0_2, %c0_3], %2 {strides = array<i32>} : memref<20x1xf32, #tpu.memory_space<vmem>>, vector<20x1xf32>,
    %cst_4 = arith.constant dense<0.000000e+00> : vector<4xf32>
    %4 = vector.multi_reduction <add>, %1, %cst_4 [1] : vector<4x256xf32> to vector<4xf32>
    %5 = vector.shape_cast %4 : vector<4xf32> to vector<4x1xf32>
    %c8 = arith.constant 8 : index
    %c0_5 = arith.constant 0 : index
    %6 = vector.load %arg4[%c8, %c0_5] : memref<20x1xf32, #tpu.memory_space<vmem>>, vector<4x1xf32>
    tpu.vector_store %arg4[%c8, %c0_5], %5 {strides = array<i32>} : memref<20x1xf32, #tpu.memory_space<vmem>>, vector<4x1xf32>,
    %c0_6 = arith.constant 0 : index
    %c0_7 = arith.constant 0 : index
    %7 = vector.load %arg4[%c0_6, %c0_7] : memref<20x1xf32, #tpu.memory_space<vmem>>, vector<20x1xf32>
    %c0_8 = arith.constant 0 : index
    %c0_9 = arith.constant 0 : index
    %8 = vector.load %arg2[%c0_8, %c0_9] : memref<3x1xf32, #tpu.memory_space<vmem>>, vector<3x1xf32>
    %9 = vector.extract_strided_slice %7 {offsets = [7, 0], sizes = [4, 1], strides = [1, 1]} : vector<20x1xf32> to vector<4x1xf32>
    %10 = vector.extract_strided_slice %8 {offsets = [0, 0], sizes = [1, 1], strides = [1, 1]} : vector<3x1xf32> to vector<1x1xf32>
    %11 = vector.broadcast %10 : vector<1x1xf32> to vector<4x1xf32>
    %12 = arith.mulf %9, %11 : vector<4x1xf32>
    %13 = vector.extract_strided_slice %7 {offsets = [8, 0], sizes = [4, 1], strides = [1, 1]} : vector<20x1xf32> to vector<4x1xf32>
    %14 = vector.extract_strided_slice %8 {offsets = [1, 0], sizes = [1, 1], strides = [1, 1]} : vector<3x1xf32> to vector<1x1xf32>
    %15 = vector.broadcast %14 : vector<1x1xf32> to vector<4x1xf32>
    %16 = arith.mulf %13, %15 : vector<4x1xf32>
    %17 = arith.addf %12, %16 : vector<4x1xf32>
    %18 = vector.extract_strided_slice %7 {offsets = [9, 0], sizes = [4, 1], strides = [1, 1]} : vector<20x1xf32> to vector<4x1xf32>
    %19 = vector.extract_strided_slice %8 {offsets = [2, 0], sizes = [1, 1], strides = [1, 1]} : vector<3x1xf32> to vector<1x1xf32>
    %20 = vector.broadcast %19 : vector<1x1xf32> to vector<4x1xf32>
    %21 = arith.mulf %18, %20 : vector<4x1xf32>
    %22 = arith.addf %17, %21 : vector<4x1xf32>
    %23 = arith.negf %22 : vector<4x1xf32>
    %24 = math.exp %23 : vector<4x1xf32>
    %cst_10 = arith.constant 1.000000e+00 : f32
    %25 = vector.broadcast %cst_10 : f32 to vector<4x1xf32>
    %26 = arith.addf %25, %24 : vector<4x1xf32>
    %27 = arith.divf %25, %26 : vector<4x1xf32>
    %28 = vector.broadcast %27 : vector<4x1xf32> to vector<4x256xf32>
    %29 = arith.mulf %1, %28 : vector<4x256xf32>
    %c0_11 = arith.constant 0 : index
    %c0_12 = arith.constant 0 : index
    %c0_13 = arith.constant 0 : index
    %30 = vector.load %arg3[%c0_11, %c0_12, %c0_13] : memref<1x4x256xf32, #tpu.memory_space<vmem>>, vector<1x4x256xf32>
    %31 = vector.shape_cast %30 : vector<1x4x256xf32> to vector<4x256xf32>
    %32 = vector.shape_cast %29 : vector<4x256xf32> to vector<1x4x256xf32>
    tpu.vector_store %arg3[%c0_11, %c0_12, %c0_13], %32 {strides = array<i32>} : memref<1x4x256xf32, #tpu.memory_space<vmem>>, vector<1x4x256xf32>,
    return
  }
  func.func @transform_0(%arg0: i32) -> (i32, i32, i32) {
    %c0_i32 = arith.constant 0 : i32
    %c0_i32_0 = arith.constant 0 : i32
    %c0_i32_1 = arith.constant 0 : i32
    return %arg0, %c0_i32, %c0_i32_0 : i32, i32, i32
  }
  func.func @transform_1(%arg0: i32) -> (i32, i32) {
    %c0_i32 = arith.constant 0 : i32
    %c0_i32_0 = arith.constant 0 : i32
    %c0_i32_1 = arith.constant 0 : i32
    return %c0_i32, %c0_i32_0 : i32, i32
  }
  func.func @transform_2(%arg0: i32) -> (i32, i32, i32) {
    %c0_i32 = arith.constant 0 : i32
    %c0_i32_0 = arith.constant 0 : i32
    %c0_i32_1 = arith.constant 0 : i32
    return %arg0, %c0_i32, %c0_i32_0 : i32, i32, i32
  }
}

</mosaic_0001>

<llo_original>
// kernel: eca_forward.1
$region0: #{eca_forward.1}
  #allocation0 [shape = 'u32[]', space=smem, size = 0x4, offset = 0x4, fixed_abs, tag = 'smem constant byte address 0x4 - core index']
  #allocation1 [shape = 'u32[144,128]{1,0:T(1,128)}', space=vmem, size = 0x12000, scoped, tag = 'internal scratch']
  #allocation2 [shape = 'f32[20,1]{1,0:T(8,128)}', space=vmem, size = 0x3000, scoped, tag = 'scratch operand']
  %s0 = inlined_call_operand.vmem [shape: f32[2,4,256], index: 0, kind: input, shape index: {}]
  %s1 = inlined_call_operand.vmem [shape: f32[3,1], index: 1, kind: input, shape index: {}]
  %s2 = inlined_call_operand.vmem [shape: f32[2,4,256], index: 2, kind: output, shape index: {}]
  %s3 = sld [smem:[#allocation0]]
  $region41: #{eca_forward.1} parent=0
    _
  %s5 = ssub.s32 1, %s3
  %s6 = scalar_select 0, %s5, %s3
  loop: start=0, step=1, limit=4
  $region2: #{eca_forward.1} parent=0 // loop_pre_header
    _
  $region3: #{eca_forward.1} parent=0 // loop_header
    %s8 = sphi 0, %s12
    %p9 = scmp.ge.s32.totalorder %s8, 4
    %s18 = sphi 0, %s20
    %s21 = sphi 0, %s18
    %s22 = sphi 0, %s21
    %s38 = sphi 0, %s22
    %s42 = sphi 0, %s42
    %s44 = sphi 0, %s42
    %s45 = sphi 0, %s44
    %s59 = sphi 0, %s45
    %s65 = sphi 0, %s67
    %s68 = sphi 0, %s65
    %s69 = sphi 0, %s68
    %s85 = sphi 0, %s69
  $region4: #{eca_forward.1} parent=0 // loop_header_branch
    %11 = sbr.rel (%p9) target = $region8
  $region5: #{eca_forward.1} parent=0 // loop_body
    %s13 = ssub.s32 %s8, 1
    %s14 = ssub.s32 %s8, 2
    %s15 = sadd.s32 %s8, 1
    %s16 = ssub.s32 %s8, %s15
    %p17 = scmp.eq.s32.totalorder %s16, 0
    %s19 = sadd.s32 %s18, 1
    %s20 = scalar_select %p17, %s18, %s19
    %p23 = pneg %p17
    %p24 = scmp.eq.s32.totalorder %s8, 1
    %p25 = por %p23, %p24
    %p26 = scmp.ne.s32.totalorder %s18, %s21
    %p27 = scmp.eq.s32.totalorder %s8, 0
    %p28 = por %p26, %p27
    %p29 = scmp.ne.s32.totalorder %s18, %s21
    %p30 = scmp.eq.s32.totalorder %s13, 1
    %p31 = por %p29, %p30
    %p32 = scmp.ne.s32.totalorder %s21, %s22
    %p33 = scmp.eq.s32.totalorder %s13, 0
    %p34 = por %p32, %p33
    %p35 = scmp.ne.s32.totalorder %s21, %s22
    %p36 = scmp.eq.s32.totalorder %s14, 1
    %p37 = por %p35, %p36
    %p39 = scmp.ne.s32.totalorder %s22, %s38
    %p40 = scmp.eq.s32.totalorder %s14, 0
    %p41 = por %p39, %p40
    %s43 = sadd.s32 %s42, 1
    %p46 = scmp.eq.s32.totalorder %s8, 1
    %p47 = scmp.ne.s32.totalorder %s42, %s44
    %p48 = scmp.eq.s32.totalorder %s8, 0
    %p49 = por %p47, %p48
    %p50 = scmp.ne.s32.totalorder %s42, %s44
    %p51 = scmp.eq.s32.totalorder %s13, 1
    %p52 = por %p50, %p51
    %p53 = scmp.ne.s32.totalorder %s44, %s45
    %p54 = scmp.eq.s32.totalorder %s13, 0
    %p55 = por %p53, %p54
    %p56 = scmp.ne.s32.totalorder %s44, %s45
    %p57 = scmp.eq.s32.totalorder %s14, 1
    %p58 = por %p56, %p57
    %p60 = scmp.ne.s32.totalorder %s45, %s59
    %p61 = scmp.eq.s32.totalorder %s14, 0
    %p62 = por %p60, %p61
    %s63 = ssub.s32 %s8, %s15
    %p64 = scmp.eq.s32.totalorder %s63, 0
    %s66 = sadd.s32 %s65, 1
    %s67 = scalar_select %p64, %s65, %s66
    %p70 = pneg %p64
    %p71 = scmp.eq.s32.totalorder %s8, 1
    %p72 = por %p70, %p71
    %p73 = scmp.ne.s32.totalorder %s65, %s68
    %p74 = scmp.eq.s32.totalorder %s8, 0
    %p75 = por %p73, %p74
    %p76 = scmp.ne.s32.totalorder %s65, %s68
    %p77 = scmp.eq.s32.totalorder %s13, 1
    %p78 = por %p76, %p77
    %p79 = scmp.ne.s32.totalorder %s68, %s69
    %p80 = scmp.eq.s32.totalorder %s13, 0
    %p81 = por %p79, %p80
    %p82 = scmp.ne.s32.totalorder %s68, %s69
    %p83 = scmp.eq.s32.totalorder %s14, 1
    %p84 = por %p82, %p83
    %p86 = scmp.ne.s32.totalorder %s69, %s85
    %p87 = scmp.eq.s32.totalorder %s14, 0
    %p88 = por %p86, %p87
    %p89 = scmp.le.s32.totalorder 1, %s8
    %p90 = scmp.lt.s32.totalorder %s8, 3
    %p91 = pnand %p89, %p90
    %p92 = pneg %p91
    // Predicated region
    $region9: #{eca_forward.1} parent=5 // pred_check
      _
    $region10: #{eca_forward.1} parent=5 // pred_check_branch
      %94 = sbr.rel (%p91) target = $region12
    $region11: #{eca_forward.1} parent=5 // pred_region
      %s95 = ssub.s32 %s8, 1
      // Predicated region
      $region13: #{eca_forward.1} parent=11 // pred_check
        %p96 = pneg %p55
      $region14: #{eca_forward.1} parent=11 // pred_check_branch
        %98 = sbr.rel (%p96) target = $region16
      $region15: #{eca_forward.1} parent=11 // pred_region
        _
      $region16: #{eca_forward.1} parent=11 // pred_fallthru
        _
    $region12: #{eca_forward.1} parent=5 // pred_fallthru
      _
    %p99 = scmp.lt.s32.totalorder %s8, 2
    // Predicated region
    $region17: #{eca_forward.1} parent=5 // pred_check
      %p100 = pneg %p99
    $region18: #{eca_forward.1} parent=5 // pred_check_branch
      %102 = sbr.rel (%p100) target = $region20
    $region19: #{eca_forward.1} parent=5 // pred_region
      // Predicated region
      $region21: #{eca_forward.1} parent=19 // pred_check
        %p103 = pneg %p28
      $region22: #{eca_forward.1} parent=19 // pred_check_branch
        %105 = sbr.rel (%p103) target = $region24
      $region23: #{eca_forward.1} parent=19 // pred_region
        %p106 = scmp.lt.s32.totalorder %s8, 1
        %s107 = scalar_select %p106, %s8, 1
        %s108 = smul.addr %s107, 2
        %s109 = smul.addr %s108, 4
        %s110 = scalar_lea.vmem %s0, %s109
      $region24: #{eca_forward.1} parent=19 // pred_fallthru
        _
    $region20: #{eca_forward.1} parent=5 // pred_fallthru
      _
    %p111 = scmp.le.s32.totalorder 1, %s8
    %p112 = scmp.lt.s32.totalorder %s8, 3
    %p113 = pnand %p111, %p112
    %p114 = pneg %p113
    // Predicated region
    $region25: #{eca_forward.1} parent=5 // pred_check
      _
    $region26: #{eca_forward.1} parent=5 // pred_check_branch
      %116 = sbr.rel (%p113) target = $region28
    $region27: #{eca_forward.1} parent=5 // pred_region
      %s117 = ssub.s32 %s8, 1
      %p118 = scmp.lt.s32.totalorder %s13, 1
      %s119 = scalar_select %p118, %s13, 1
      %s120 = smul.addr %s119, 2
      %s121 = smul.addr %s120, 4
      %s122 = scalar_lea.vmem %s0, %s121
      %p123 = pneg %p34
      %p124 = pneg %p31
      %p125 = pneg %p55
      %p126 = pneg %p52
      %p127 = pneg %p81
      %p128 = pneg %p78
      %p129 = scmp.lt.s32.totalorder %s13, 1
      %s130 = scalar_select %p129, %s13, 1
      %s131 = smul.addr %s130, 2
      %s132 = smul.addr %s131, 4
      %s133 = scalar_lea.vmem %s2, %s132
      %p134 = scmp.lt.s32.totalorder %s13, 1
      %s135 = scalar_select %p134, %s13, 1
      %s136 = smul.addr %s135, 2
      %s137 = smul.addr %s136, 4
      %s138 = scalar_lea.vmem %s0, %s137
      %p139 = scmp.lt.s32.totalorder %s13, 1
      %s140 = scalar_select %p139, %s13, 1
      %s141 = smul.addr %s140, 2
      %s142 = smul.addr %s141, 4
      %s143 = scalar_lea.vmem %s2, %s142
      %v144 = vld [vmem:[%s138] sm:$0xff]
      %vm145 = vcmask 7168
      %146 = vst.msk [vmem:[#allocation2] sm:$0xff] %vm145, 0.0
      %147 = vst.msk [vmem:[#allocation2 + $0x8] sm:$0xff] %vm145, 0.0
      %vm148 = vcmask 3072
      %149 = vst.msk [vmem:[#allocation2 + $0x10] sm:$0xf] %vm148, 0.0
      %v151 = vcombine.high %v144, %v144
      %vm153 = vcmask 1043456
      %v154 = vsel %vm153, %v144, 0.0
      %v155 = vsel %vm153, %v151, 0.0
      %v156 = vadd.f32 %v154, %v155
      %157 = vadd.xlane.f32.xlu0 %v156
      %v158 = vpop.xlane.xlu0 %157
      %159 = vst.msk [vmem:[#allocation2 + $0x8] sm:$0xf] %vm148, %v158
      %v160 = vld [vmem:[#allocation2] sm:$0xff]
      %v161 = vld [vmem:[#allocation2 + $0x8] sm:$0xff]
      %v162 = vld [vmem:[%s1] sm:$0x7]
      %v163 = vlaneseq
      %v164 = vshrl.u32 %v163, 7
      %v165 = vsub.s32 0, %v164
      %v166 = vrot.slane %v162, %v165
      %v167 = vmul.f32 %v160, %v166
      %v168 = vmul.f32 %v161, %v166
      %v169 = vlaneseq
      %v170 = vshrl.u32 %v169, 7
      %v171 = vsub.s32 1, %v170
      %v172 = vrot.slane %v162, %v171
      %v173 = vmul.f32 %v161, %v172
      %v175 = vrot.slane %v173, 1
      %v177 = vadd.f32 %v167, %v175
      %v178 = vadd.f32 %v168, %v175
      %v179 = vlaneseq
      %v180 = vshrl.u32 %v179, 7
      %v181 = vsub.s32 2, %v180
      %v182 = vrot.slane %v162, %v181
      %v183 = vmul.f32 %v161, %v182
      %v185 = vrot.slane %v183, 2
      %v187 = vadd.f32 %v177, %v185
      %v188 = vadd.f32 %v178, %v185
      %v189 = vxor.u32 %v187, 2147483648
      %v190 = vxor.u32 %v188, 2147483648
      %v191 = vmul.f32 %v189, 1.442695
      %v192 = vpow.pop %v191
      %v193 = vmul.f32 %v190, 1.442695
      %v194 = vpow.pop %v193
      %v195 = vadd.f32 %v192, 1.0
      %v196 = vadd.f32 %v194, 1.0
      %v197 = vrcp.pop %v195
      %v198 = vmul.f32 1.0, %v197
      %v199 = vrcp.pop %v196
      %v200 = vmul.f32 1.0, %v199
      %202 = vset.pattern.permute.xlu0 0
      %203 = vperm.xlu0 %202, %v198
      %v204 = vpop.permute.xlu0 %203
      %206 = vset.pattern.permute.xlu0 0
      %207 = vperm.xlu0 %206, %v200
      %v208 = vpop.permute.xlu0 %207
      %v210 = vunpack.c.l.s4 1985246804
      %v211 = vunpack.c.0.s8 %v210
      %v212 = vlaneseq
      %v213 = vshrl.u32 %v212, 7
      %v214 = vsub.s32 %v211, %v213
      %v215 = vrot.slane %v204, %v214
      %v217 = vunpack.c.l.s4 839922192
      %v218 = vunpack.c.0.s8 %v217
      %v219 = vlaneseq
      %v220 = vshrl.u32 %v219, 7
      %v221 = vsub.s32 %v218, %v220
      %v222 = vrot.slane %v208, %v221
      %vm223 = vcmask 1040384
      %vm224 = vcmask 1044484
      %vm225 = vmor %vm223, %vm224
      %v226 = vrot.slane %v215, 7
      %v227 = vrot.slane %v226, 4
      %v228 = vrot.slane %v222, 7
      %v229 = vsel %vm225, %v227, %v228
      %v231 = vmul.f32 %v144, %v229
      %232 = vst [vmem:[%s143] sm:$0xff] %v231
      %p233 = scmp.lt.s32.totalorder %s13, 1
      %s234 = scalar_select %p233, %s13, 1
      %s235 = smul.addr %s234, 2
      %s236 = smul.addr %s235, 4
      %s237 = scalar_lea.vmem %s2, %s236
      // Predicated region
      $region29: #{eca_forward.1} parent=27 // pred_check
        %p238 = pneg %p78
      $region30: #{eca_forward.1} parent=27 // pred_check_branch
        %240 = sbr.rel (%p238) target = $region32
      $region31: #{eca_forward.1} parent=27 // pred_region
        _
      $region32: #{eca_forward.1} parent=27 // pred_fallthru
        _
    $region28: #{eca_forward.1} parent=5 // pred_fallthru
      _
    %p241 = scmp.le.s32.totalorder 2, %s8
    // Predicated region
    $region33: #{eca_forward.1} parent=5 // pred_check
      %p242 = pneg %p241
    $region34: #{eca_forward.1} parent=5 // pred_check_branch
      %244 = sbr.rel (%p242) target = $region36
    $region35: #{eca_forward.1} parent=5 // pred_region
      %s245 = ssub.s32 %s8, 2
      // Predicated region
      $region37: #{eca_forward.1} parent=35 // pred_check
        %p246 = pneg %p84
      $region38: #{eca_forward.1} parent=35 // pred_check_branch
        %248 = sbr.rel (%p246) target = $region40
      $region39: #{eca_forward.1} parent=35 // pred_region
        %p249 = scmp.lt.s32.totalorder %s14, 1
        %s250 = scalar_select %p249, %s14, 1
        %s251 = smul.addr %s250, 2
        %s252 = smul.addr %s251, 4
        %s253 = scalar_lea.vmem %s2, %s252
      $region40: #{eca_forward.1} parent=35 // pred_fallthru
        _
    $region36: #{eca_forward.1} parent=5 // pred_fallthru
      _
  $region6: #{eca_forward.1} parent=0 // loop_footer
    %s12 = sadd.s32 1, %s8
  $region7: #{eca_forward.1} parent=0 // loop_footer_branch
    %7 = sbr.rel target = $region3
  $region8: #{eca_forward.1} parent=0 // loop_exit
    _

</llo_original>
